<compile_context>
chip_gen: v7x
topology: tpu7x:2x2x1
jax: 0.10.0
libtpu: 0.0.40
codegen_flags: <defaults>
</compile_context>

<pallas_src>
import functools

import jax
import jax.numpy as jnp
from jax.experimental import pallas as pl
from jax.experimental.pallas import tpu as pltpu


def _round_up(x, m):
    return ((x + m - 1) // m) * m


def _mlp_kernel(x_ref, w1_ref, b1_ref, w2_ref, b2_ref, w3_ref, b3_ref, o_ref):
    """One batch tile of the 3-layer MLP; batch on the lane axis.

    x_ref : (in_dim, TB)    obs tile (feature-major, batch on lanes)
    w*_ref: (out_f, in_f)   PyTorch-native weights, resident in VMEM
    b*_ref: (out_f, 1)      broadcasts along the lane (batch) axis
    o_ref : (out_dim, TB)
    """
    x = x_ref[...]
    h1 = jnp.maximum(
        jnp.dot(w1_ref[...], x, preferred_element_type=jnp.float32) + b1_ref[...],
        0.0)
    h2 = jnp.maximum(
        jnp.dot(w2_ref[...], h1, preferred_element_type=jnp.float32) + b2_ref[...],
        0.0)
    out = jnp.dot(w3_ref[...], h2, preferred_element_type=jnp.float32) + b3_ref[...]
    o_ref[...] = out.astype(o_ref.dtype)


def feedforward_nn(obs, params, *, block_b=8192):
    """obs: (B, in_dim) float32; params: dict with w1,b1,w2,b2,w3,b3.

    Weights are stored (out_features, in_features), biases (out_features, 1),
    so the kernel computes W @ x + b == (obs @ W.T + b.T).T, matching PyTorch.
    """
    w1, b1, w2, b2, w3, b3 = (params["w1"], params["b1"], params["w2"],
                              params["b2"], params["w3"], params["b3"])
    B, in_dim = obs.shape
    h1_dim = w1.shape[0]
    h2_dim = w2.shape[0]
    out_dim = w3.shape[0]

    # Batch tile on the lane axis: multiple of 128, clamped for small batches.
    tb = min(block_b, _round_up(B, 128))
    # v7x megacore: if one (large) tile would collapse the grid to a single
    # step, split it in two so the "parallel" axis shards across both cores.
    if tb >= 256 and _round_up(B, tb) == tb:
        tb = _round_up((B + 1) // 2, 128)
    b_pad = _round_up(B, tb)

    # Pad batch (rows of padding compute garbage that is sliced off), then
    # transpose so batch is the lane (last) dimension.
    if b_pad != B:
        obs = jnp.pad(obs, ((0, b_pad - B), (0, 0)))
    obs_t = obs.T                                   # (in_dim, b_pad)

    grid = (b_pad // tb,)

    # obs / output tiled along the lane (batch) axis; weights/biases use
    # grid-invariant blocks (fetched once, resident in VMEM across all steps).
    in_specs = [
        pl.BlockSpec((in_dim, tb), lambda i: (0, i)),    # obs tile
        pl.BlockSpec(w1.shape, lambda i: (0, 0)),        # w1 (64, in_dim)
        pl.BlockSpec(b1.shape, lambda i: (0, 0)),        # b1 (64, 1)
        pl.BlockSpec(w2.shape, lambda i: (0, 0)),        # w2 (32, 64)
        pl.BlockSpec(b2.shape, lambda i: (0, 0)),        # b2 (32, 1)
        pl.BlockSpec(w3.shape, lambda i: (0, 0)),        # w3 (out_dim, 32)
        pl.BlockSpec(b3.shape, lambda i: (0, 0)),        # b3 (out_dim, 1)
    ]
    out_spec = pl.BlockSpec((out_dim, tb), lambda i: (0, i))

    itemsize = jnp.dtype(jnp.float32).itemsize
    flops = 2 * b_pad * (in_dim * h1_dim + h1_dim * h2_dim + h2_dim * out_dim)
    bytes_accessed = itemsize * (
        b_pad * in_dim                       # obs stream in
        + b_pad * out_dim                    # output stream out
        + in_dim * h1_dim + h1_dim           # w1, b1
        + h1_dim * h2_dim + h2_dim           # w2, b2
        + h2_dim * out_dim + out_dim         # w3, b3
    )

    out_t = pl.pallas_call(
        _mlp_kernel,
        out_shape=jax.ShapeDtypeStruct((out_dim, b_pad), jnp.float32),
        grid=grid,
        in_specs=in_specs,
        out_specs=out_spec,
        compiler_params=pltpu.CompilerParams(
            dimension_semantics=("parallel",),   # megacore-shard batch on v7x
        ),
        cost_estimate=pl.CostEstimate(
            flops=flops, transcendentals=0, bytes_accessed=bytes_accessed),
    )(obs_t, w1, b1, w2, b2, w3, b3)

    return out_t[:, :B].T                            # (B, out_dim)


def init_params(key, in_dim, out_dim):
    """Deterministic init mimicking nn.Linear's uniform(-1/sqrt(fan_in), +).
    Weights stored (out_features, in_features); biases (out_features, 1)."""
    def linear(k, fan_in, fan_out):
        kw, kb = jax.random.split(k)
        bound = 1.0 / jnp.sqrt(fan_in)
        w = jax.random.uniform(kw, (fan_out, fan_in), jnp.float32, -bound, bound)
        b = jax.random.uniform(kb, (fan_out, 1), jnp.float32, -bound, bound)
        return w, b

    k1, k2, k3 = jax.random.split(key, 3)
    w1, b1 = linear(k1, in_dim, 64)
    w2, b2 = linear(k2, 64, 32)
    w3, b3 = linear(k3, 32, out_dim)
    return {"w1": w1, "b1": b1, "w2": w2, "b2": b2, "w3": w3, "b3": b3}


def _reference(obs, p):
    h1 = jnp.maximum(obs @ p["w1"].T + p["b1"][:, 0], 0.0)
    h2 = jnp.maximum(h1 @ p["w2"].T + p["b2"][:, 0], 0.0)
    return h2 @ p["w3"].T + p["b3"][:, 0]


if __name__ == "__main__":
    key = jax.random.PRNGKey(0)
    k_obs, k_params, k_obs2, k_obs3 = jax.random.split(key, 4)

    batch, in_dim, out_dim = 8, 16, 4
    params = init_params(k_params, in_dim, out_dim)

    # 1) Small batch, single grid step (batch padded up to 128 lanes).
    obs = jax.random.normal(k_obs, (batch, in_dim), dtype=jnp.float32)
    out = jax.block_until_ready(feedforward_nn(obs, params))
    ref = _reference(obs, params)
    assert out.shape == (batch, out_dim)
    assert jnp.allclose(out, ref, atol=1e-5, rtol=1e-5), "f32 mismatch vs reference"

    # 2) Multi-step grid with batch padding (exercises tiling + pipelining).
    batch2 = 300
    obs2 = jax.random.normal(k_obs2, (batch2, in_dim), dtype=jnp.float32)
    out2 = jax.block_until_ready(feedforward_nn(obs2, params, block_b=128))
    ref2 = _reference(obs2, params)
    assert out2.shape == (batch2, out_dim)
    assert jnp.allclose(out2, ref2, atol=1e-5, rtol=1e-5), "gridded f32 mismatch"

    # 3) Large-tile path: default block_b, grid auto-split into >=2 steps.
    batch3 = 1000
    obs3 = jax.random.normal(k_obs3, (batch3, in_dim), dtype=jnp.float32)
    out3 = jax.block_until_ready(feedforward_nn(obs3, params))
    ref3 = _reference(obs3, params)
    assert out3.shape == (batch3, out_dim)
    assert jnp.allclose(out3, ref3, atol=1e-5, rtol=1e-5), "large-tile f32 mismatch"

    print("KERNEL_OK")
</pallas_src>

<mosaic_0001>
module attributes {stable_mosaic.version = 11 : i64} {
  func.func @_mlp_kernel(%arg0: i32, %arg1: memref<16x128xf32, #tpu.memory_space<vmem>>, %arg2: memref<64x16xf32, #tpu.memory_space<vmem>>, %arg3: memref<64x1xf32, #tpu.memory_space<vmem>>, %arg4: memref<32x64xf32, #tpu.memory_space<vmem>>, %arg5: memref<32x1xf32, #tpu.memory_space<vmem>>, %arg6: memref<4x32xf32, #tpu.memory_space<vmem>>, %arg7: memref<4x1xf32, #tpu.memory_space<vmem>>, %arg8: memref<4x128xf32, #tpu.memory_space<vmem>>) attributes {dimension_semantics = [#tpu.dimension_semantics<parallel>], iteration_bounds = array<i64: 1>, scalar_prefetch = 0 : i64, scratch_operands = 0 : i64, tpu.core_type = #tpu.core_type<tc>, window_params = [{transform_indices = @transform_0, window_bounds = array<i64: 16, 128>}, {pipeline_mode = #tpu.pipeline_mode<synchronous>, transform_indices = @transform_1, window_bounds = array<i64: 64, 16>}, {pipeline_mode = #tpu.pipeline_mode<synchronous>, transform_indices = @transform_2, window_bounds = array<i64: 64, 1>}, {pipeline_mode = #tpu.pipeline_mode<synchronous>, transform_indices = @transform_3, window_bounds = array<i64: 32, 64>}, {pipeline_mode = #tpu.pipeline_mode<synchronous>, transform_indices = @transform_4, window_bounds = array<i64: 32, 1>}, {pipeline_mode = #tpu.pipeline_mode<synchronous>, transform_indices = @transform_5, window_bounds = array<i64: 4, 32>}, {pipeline_mode = #tpu.pipeline_mode<synchronous>, transform_indices = @transform_6, window_bounds = array<i64: 4, 1>}, {transform_indices = @transform_7, window_bounds = array<i64: 4, 128>}]} {
    %c0 = arith.constant 0 : index
    %c0_0 = arith.constant 0 : index
    %0 = vector.load %arg1[%c0, %c0_0] : memref<16x128xf32, #tpu.memory_space<vmem>>, vector<16x128xf32>
    %c0_1 = arith.constant 0 : index
    %c0_2 = arith.constant 0 : index
    %1 = vector.load %arg2[%c0_1, %c0_2] : memref<64x16xf32, #tpu.memory_space<vmem>>, vector<64x16xf32>
    %cst = arith.constant dense<0.000000e+00> : vector<64x128xf32>
    %2 = tpu.matmul %1, %0, %cst {dimension_numbers = #tpu.dot_dimension_numbers<[1], [0], [0], [1], [0, 0, 1, 1], [], []>} : vector<64x16xf32>, vector<16x128xf32>, vector<64x128xf32> -> vector<64x128xf32>
    %c0_3 = arith.constant 0 : index
    %c0_4 = arith.constant 0 : index
    %3 = vector.load %arg3[%c0_3, %c0_4] : memref<64x1xf32, #tpu.memory_space<vmem>>, vector<64x1xf32>
    %4 = vector.broadcast %3 : vector<64x1xf32> to vector<64x128xf32>
    %5 = arith.addf %2, %4 : vector<64x128xf32>
    %cst_5 = arith.constant 0.000000e+00 : f32
    %6 = vector.broadcast %cst_5 : f32 to vector<64x128xf32>
    %7 = arith.maximumf %5, %6 : vector<64x128xf32>
    %c0_6 = arith.constant 0 : index
    %c0_7 = arith.constant 0 : index
    %8 = vector.load %arg4[%c0_6, %c0_7] : memref<32x64xf32, #tpu.memory_space<vmem>>, vector<32x64xf32>
    %cst_8 = arith.constant dense<0.000000e+00> : vector<32x128xf32>
    %9 = tpu.matmul %8, %7, %cst_8 {dimension_numbers = #tpu.dot_dimension_numbers<[1], [0], [0], [1], [0, 0, 1, 1], [], []>} : vector<32x64xf32>, vector<64x128xf32>, vector<32x128xf32> -> vector<32x128xf32>
    %c0_9 = arith.constant 0 : index
    %c0_10 = arith.constant 0 : index
    %10 = vector.load %arg5[%c0_9, %c0_10] : memref<32x1xf32, #tpu.memory_space<vmem>>, vector<32x1xf32>
    %11 = vector.broadcast %10 : vector<32x1xf32> to vector<32x128xf32>
    %12 = arith.addf %9, %11 : vector<32x128xf32>
    %cst_11 = arith.constant 0.000000e+00 : f32
    %13 = vector.broadcast %cst_11 : f32 to vector<32x128xf32>
    %14 = arith.maximumf %12, %13 : vector<32x128xf32>
    %c0_12 = arith.constant 0 : index
    %c0_13 = arith.constant 0 : index
    %15 = vector.load %arg6[%c0_12, %c0_13] : memref<4x32xf32, #tpu.memory_space<vmem>>, vector<4x32xf32>
    %cst_14 = arith.constant dense<0.000000e+00> : vector<4x128xf32>
    %16 = tpu.matmul %15, %14, %cst_14 {dimension_numbers = #tpu.dot_dimension_numbers<[1], [0], [0], [1], [0, 0, 1, 1], [], []>} : vector<4x32xf32>, vector<32x128xf32>, vector<4x128xf32> -> vector<4x128xf32>
    %c0_15 = arith.constant 0 : index
    %c0_16 = arith.constant 0 : index
    %17 = vector.load %arg7[%c0_15, %c0_16] : memref<4x1xf32, #tpu.memory_space<vmem>>, vector<4x1xf32>
    %18 = vector.broadcast %17 : vector<4x1xf32> to vector<4x128xf32>
    %19 = arith.addf %16, %18 : vector<4x128xf32>
    %c0_17 = arith.constant 0 : index
    %c0_18 = arith.constant 0 : index
    %20 = vector.load %arg8[%c0_17, %c0_18] : memref<4x128xf32, #tpu.memory_space<vmem>>, vector<4x128xf32>
    tpu.vector_store %arg8[%c0_17, %c0_18], %19 {strides = array<i32>} : memref<4x128xf32, #tpu.memory_space<vmem>>, vector<4x128xf32>,
    return
  }
  func.func @transform_0(%arg0: i32) -> (i32, i32) {
    %c0_i32 = arith.constant 0 : i32
    %c0_i32_0 = arith.constant 0 : i32
    return %c0_i32, %arg0 : i32, i32
  }
  func.func @transform_1(%arg0: i32) -> (i32, i32) {
    %c0_i32 = arith.constant 0 : i32
    %c0_i32_0 = arith.constant 0 : i32
    %c0_i32_1 = arith.constant 0 : i32
    return %c0_i32, %c0_i32_0 : i32, i32
  }
  func.func @transform_2(%arg0: i32) -> (i32, i32) {
    %c0_i32 = arith.constant 0 : i32
    %c0_i32_0 = arith.constant 0 : i32
    %c0_i32_1 = arith.constant 0 : i32
    return %c0_i32, %c0_i32_0 : i32, i32
  }
  func.func @transform_3(%arg0: i32) -> (i32, i32) {
    %c0_i32 = arith.constant 0 : i32
    %c0_i32_0 = arith.constant 0 : i32
    %c0_i32_1 = arith.constant 0 : i32
    return %c0_i32, %c0_i32_0 : i32, i32
  }
  func.func @transform_4(%arg0: i32) -> (i32, i32) {
    %c0_i32 = arith.constant 0 : i32
    %c0_i32_0 = arith.constant 0 : i32
    %c0_i32_1 = arith.constant 0 : i32
    return %c0_i32, %c0_i32_0 : i32, i32
  }
  func.func @transform_5(%arg0: i32) -> (i32, i32) {
    %c0_i32 = arith.constant 0 : i32
    %c0_i32_0 = arith.constant 0 : i32
    %c0_i32_1 = arith.constant 0 : i32
    return %c0_i32, %c0_i32_0 : i32, i32
  }
  func.func @transform_6(%arg0: i32) -> (i32, i32) {
    %c0_i32 = arith.constant 0 : i32
    %c0_i32_0 = arith.constant 0 : i32
    %c0_i32_1 = arith.constant 0 : i32
    return %c0_i32, %c0_i32_0 : i32, i32
  }
  func.func @transform_7(%arg0: i32) -> (i32, i32) {
    %c0_i32 = arith.constant 0 : i32
    %c0_i32_0 = arith.constant 0 : i32
    return %c0_i32, %arg0 : i32, i32
  }
}

</mosaic_0001>

<llo_original>
// kernel: tpu_custom_call.1
$region0: #{tpu_custom_call.1}
  #allocation0 [shape = 'u32[]', space=smem, size = 0x4, offset = 0x4, fixed_abs, tag = 'smem constant byte address 0x4 - core index']
  #allocation1 [shape = 'u32[144,128]{1,0:T(1,128)}', space=vmem, size = 0x12000, scoped, tag = 'internal scratch']
  %s0 = inlined_call_operand.vmem [shape: f32[16,128], index: 0, kind: input, shape index: {}]
  %s1 = inlined_call_operand.vmem [shape: f32[64,16], index: 1, kind: input, shape index: {}]
  %s2 = inlined_call_operand.vmem [shape: f32[64,1], index: 2, kind: input, shape index: {}]
  %s3 = inlined_call_operand.vmem [shape: f32[32,64], index: 3, kind: input, shape index: {}]
  %s4 = inlined_call_operand.vmem [shape: f32[32,1], index: 4, kind: input, shape index: {}]
  %s5 = inlined_call_operand.vmem [shape: f32[4,32], index: 5, kind: input, shape index: {}]
  %s6 = inlined_call_operand.vmem [shape: f32[4,1], index: 6, kind: input, shape index: {}]
  %s7 = inlined_call_operand.hbm [shape: f32[4,128], index: 7, kind: output, shape index: {}]
  %s8 = sld [smem:[#allocation0]]
  $region38: #{tpu_custom_call.1} parent=0
    _
  %s10 = ssub.s32 1, %s8
  %s11 = scalar_select 0, %s10, %s8
  $region1: #{tpu_custom_call.1} parent=0
    #allocation2 [shape = 'u8[2048]{0}', space=vmem, size = 0x800, scoped, tag = 'output window, operand 0, single buffered']
    #allocation3 [shape = 's32[1]{0}', space=sflag, size = 0x4, scoped, tag = 'scoped memory for tpu_custom_call.1']
    %12 = vsyncpa [#allocation3], 0
    // Predicated region
    $region2: #{tpu_custom_call.1} parent=1 // pred_check
      _
    $region3: #{tpu_custom_call.1} parent=1 // pred_check_branch
      %14 = sbr.rel (0) target = $region5
    $region4: #{tpu_custom_call.1} parent=1 // pred_region
      _
    $region5: #{tpu_custom_call.1} parent=1 // pred_fallthru
      _
    // Predicated region
    $region6: #{tpu_custom_call.1} parent=1 // pred_check
      _
    $region7: #{tpu_custom_call.1} parent=1 // pred_check_branch
      %16 = sbr.rel (0) target = $region9
    $region8: #{tpu_custom_call.1} parent=1 // pred_region
      _
    $region9: #{tpu_custom_call.1} parent=1 // pred_fallthru
      _
    // Predicated region
    $region10: #{tpu_custom_call.1} parent=1 // pred_check
      _
    $region11: #{tpu_custom_call.1} parent=1 // pred_check_branch
      %18 = sbr.rel (0) target = $region13
    $region12: #{tpu_custom_call.1} parent=1 // pred_region
      _
    $region13: #{tpu_custom_call.1} parent=1 // pred_fallthru
      _
    // Predicated region
    $region14: #{tpu_custom_call.1} parent=1 // pred_check
      _
    $region15: #{tpu_custom_call.1} parent=1 // pred_check_branch
      %20 = sbr.rel (0) target = $region17
    $region16: #{tpu_custom_call.1} parent=1 // pred_region
      _
    $region17: #{tpu_custom_call.1} parent=1 // pred_fallthru
      _
    // Predicated region
    $region18: #{tpu_custom_call.1} parent=1 // pred_check
      _
    $region19: #{tpu_custom_call.1} parent=1 // pred_check_branch
      %22 = sbr.rel (0) target = $region21
    $region20: #{tpu_custom_call.1} parent=1 // pred_region
      _
    $region21: #{tpu_custom_call.1} parent=1 // pred_fallthru
      _
    // Predicated region
    $region22: #{tpu_custom_call.1} parent=1 // pred_check
      _
    $region23: #{tpu_custom_call.1} parent=1 // pred_check_branch
      %24 = sbr.rel (0) target = $region25
    $region24: #{tpu_custom_call.1} parent=1 // pred_region
      _
    $region25: #{tpu_custom_call.1} parent=1 // pred_fallthru
      _
    // Predicated region
    $region26: #{tpu_custom_call.1} parent=1 // pred_check
      _
    $region27: #{tpu_custom_call.1} parent=1 // pred_check_branch
      %26 = sbr.rel (0) target = $region29
    $region28: #{tpu_custom_call.1} parent=1 // pred_region
      _
    $region29: #{tpu_custom_call.1} parent=1 // pred_fallthru
      _
    %v27 = vld [vmem:[%s0] sm:$0xff]
    %v28 = vld [vmem:[%s0 + $0x8] sm:$0xff]
    %v29 = vld [vmem:[%s1] sm:$0xff]
    %v30 = vld [vmem:[%s1 + $0x8] sm:$0xff]
    %v31 = vld [vmem:[%s1 + $0x10] sm:$0xff]
    %v32 = vld [vmem:[%s1 + $0x18] sm:$0xff]
    %v33 = vld [vmem:[%s1 + $0x20] sm:$0xff]
    %v34 = vld [vmem:[%s1 + $0x28] sm:$0xff]
    %v35 = vld [vmem:[%s1 + $0x30] sm:$0xff]
    %v36 = vld [vmem:[%s1 + $0x38] sm:$0xff]
    %v37 = vld [vmem:[%s2] sm:$0xff]
    %v38 = vld [vmem:[%s2 + $0x8] sm:$0xff]
    %v39 = vld [vmem:[%s2 + $0x10] sm:$0xff]
    %v40 = vld [vmem:[%s2 + $0x18] sm:$0xff]
    %v41 = vld [vmem:[%s2 + $0x20] sm:$0xff]
    %v42 = vld [vmem:[%s2 + $0x28] sm:$0xff]
    %v43 = vld [vmem:[%s2 + $0x30] sm:$0xff]
    %v44 = vld [vmem:[%s2 + $0x38] sm:$0xff]
    %46 = vset.pattern.permute.xlu0 0
    %47 = vperm.xlu0 %46, %v37
    %v48 = vpop.permute.xlu0 %47
    %51 = vset.pattern.permute.xlu0 0
    %52 = vperm.xlu0 %51, %v38
    %v53 = vpop.permute.xlu0 %52
    %56 = vset.pattern.permute.xlu0 0
    %57 = vperm.xlu0 %56, %v39
    %v58 = vpop.permute.xlu0 %57
    %61 = vset.pattern.permute.xlu0 0
    %62 = vperm.xlu0 %61, %v40
    %v63 = vpop.permute.xlu0 %62
    %66 = vset.pattern.permute.xlu0 0
    %67 = vperm.xlu0 %66, %v41
    %v68 = vpop.permute.xlu0 %67
    %71 = vset.pattern.permute.xlu0 0
    %72 = vperm.xlu0 %71, %v42
    %v73 = vpop.permute.xlu0 %72
    %76 = vset.pattern.permute.xlu0 0
    %77 = vperm.xlu0 %76, %v43
    %v78 = vpop.permute.xlu0 %77
    %81 = vset.pattern.permute.xlu0 0
    %82 = vperm.xlu0 %81, %v44
    %v83 = vpop.permute.xlu0 %82
    %vm85 = vcmask 130048
    %v87 = vsel %vm85, %v29, 0
    %v90 = vsel %vm85, %v30, 0
    %v93 = vsel %vm85, %v31, 0
    %v96 = vsel %vm85, %v32, 0
    %v99 = vsel %vm85, %v33, 0
    %v102 = vsel %vm85, %v34, 0
    %v105 = vsel %vm85, %v35, 0
    %v108 = vsel %vm85, %v36, 0
    %110 = vmatprep.subr.mxu0 0.0
    %111 = vmatpush1.msra.mxu0 %v27
    %112 = vmatprep.subr.mxu0 0.0
    %113 = vmatpush1.msra.mxu0 %v28
    %114 = vmatprep.subr.mxu0 0.0
    %115 = vmatpush1.msra.mxu0 0.0
    %116 = vmatprep.subr.mxu0 0.0
    %117 = vmatpush1.msra.mxu0 0.0
    %118 = vmatprep.subr.mxu0 0.0
    %119 = vmatpush1.msra.mxu0 0.0
    %120 = vmatprep.subr.mxu0 0.0
    %121 = vmatpush1.msra.mxu0 0.0
    %122 = vmatprep.subr.mxu0 0.0
    %123 = vmatpush1.msra.mxu0 0.0
    %124 = vmatprep.subr.mxu0 0.0
    %125 = vmatpush1.msra.mxu0 0.0
    %126 = vmatprep.subr.mxu0 0.0
    %127 = vmatpush1.msra.mxu0 0.0
    %128 = vmatprep.subr.mxu0 0.0
    %129 = vmatpush1.msra.mxu0 0.0
    %130 = vmatprep.subr.mxu0 0.0
    %131 = vmatpush1.msra.mxu0 0.0
    %132 = vmatprep.subr.mxu0 0.0
    %133 = vmatpush1.msra.mxu0 0.0
    %134 = vmatprep.subr.mxu0 0.0
    %135 = vmatpush1.msra.mxu0 0.0
    %136 = vmatprep.subr.mxu0 0.0
    %137 = vmatpush1.msra.mxu0 0.0
    %138 = vmatprep.subr.mxu0 0.0
    %139 = vmatpush1.msra.mxu0 0.0
    %140 = vmatprep.subr.mxu0 0.0
    %141 = vmatpush1.msra.mxu0 0.0
    %142 = vmatprep.subr.mxu0 0.0
    %143 = vmatpush1.msra.mxu0 0.0
    %144 = vmatprep.subr.mxu0 0.0
    %145 = vmatpush1.msra.mxu0 0.0
    %146 = vmatprep.subr.mxu0 0.0
    %147 = vmatpush1.msra.mxu0 0.0
    %148 = vmatprep.subr.mxu0 0.0
    %149 = vmatpush1.msra.mxu0 0.0
    %150 = vmatprep.subr.mxu0 0.0
    %151 = vmatpush1.msra.mxu0 0.0
    %152 = vmatprep.subr.mxu0 0.0
    %153 = vmatpush1.msra.mxu0 0.0
    %154 = vmatprep.subr.mxu0 0.0
    %155 = vmatpush1.msra.mxu0 0.0
    %156 = vmatprep.subr.mxu0 0.0
    %157 = vmatpush1.msra.mxu0 0.0
    %158 = vmatprep.subr.mxu0 0.0
    %159 = vmatpush1.msra.mxu0 0.0
    %160 = vmatprep.subr.mxu0 0.0
    %161 = vmatpush1.msra.mxu0 0.0
    %162 = vmatprep.subr.mxu0 0.0
    %163 = vmatpush1.msra.mxu0 0.0
    %164 = vmatprep.subr.mxu0 0.0
    %165 = vmatpush1.msra.mxu0 0.0
    %166 = vmatprep.subr.mxu0 0.0
    %167 = vmatpush1.msra.mxu0 0.0
    %168 = vmatprep.subr.mxu0 0.0
    %169 = vmatpush1.msra.mxu0 0.0
    %170 = vmatprep.subr.mxu0 0.0
    %171 = vmatpush1.msra.mxu0 0.0
    %172 = vmatprep.subr.mxu0 0.0
    %173 = vmatpush1.msra.mxu0 0.0
    %174 = vmatprep.mubr.f32.mxu0 0.0
    %175 = vmatmul.mubr.f32.gmra.mrb[0].mxu0 %v87
    %v176 = vpop.f32.mrb[0].mxu0
    %v177 = vadd.f32 %v48, %v176
    %v178 = vpop.f32.mrb[0].mxu0
    %179 = vmatprep.mubr.f32.mxu0 0.0
    %180 = vmatmul.mubr.f32.gmra.mrb[0].mxu0 %v90
    %v181 = vpop.f32.mrb[0].mxu0
    %v182 = vadd.f32 %v53, %v181
    %v183 = vpop.f32.mrb[0].mxu0
    %184 = vmatprep.mubr.f32.mxu0 0.0
    %185 = vmatmul.mubr.f32.gmra.mrb[0].mxu0 %v93
    %v186 = vpop.f32.mrb[0].mxu0
    %v187 = vadd.f32 %v58, %v186
    %v188 = vpop.f32.mrb[0].mxu0
    %189 = vmatprep.mubr.f32.mxu0 0.0
    %190 = vmatmul.mubr.f32.gmra.mrb[0].mxu0 %v96
    %v191 = vpop.f32.mrb[0].mxu0
    %v192 = vadd.f32 %v63, %v191
    %v193 = vpop.f32.mrb[0].mxu0
    %194 = vmatprep.mubr.f32.mxu0 0.0
    %195 = vmatmul.mubr.f32.gmra.mrb[0].mxu0 %v99
    %v196 = vpop.f32.mrb[0].mxu0
    %v197 = vadd.f32 %v68, %v196
    %v198 = vpop.f32.mrb[0].mxu0
    %199 = vmatprep.mubr.f32.mxu0 0.0
    %200 = vmatmul.mubr.f32.gmra.mrb[0].mxu0 %v102
    %v201 = vpop.f32.mrb[0].mxu0
    %v202 = vadd.f32 %v73, %v201
    %v203 = vpop.f32.mrb[0].mxu0
    %204 = vmatprep.mubr.f32.mxu0 0.0
    %205 = vmatmul.mubr.f32.gmra.mrb[0].mxu0 %v105
    %v206 = vpop.f32.mrb[0].mxu0
    %v207 = vadd.f32 %v78, %v206
    %v208 = vpop.f32.mrb[0].mxu0
    %209 = vmatprep.mubr.f32.mxu0 0.0
    %210 = vmatmul.mubr.f32.gmra.mrb[0].mxu0 %v108
    %v211 = vpop.f32.mrb[0].mxu0
    %v212 = vadd.f32 %v83, %v211
    %v213 = vpop.f32.mrb[0].mxu0
    %214 = vdwg.mxu0
    %v215 = vmax.f32 %v177, 0.0
    %v216 = vmax.f32 %v182, 0.0
    %v217 = vmax.f32 %v187, 0.0
    %v218 = vmax.f32 %v192, 0.0
    %v219 = vmax.f32 %v197, 0.0
    %v220 = vmax.f32 %v202, 0.0
    %v221 = vmax.f32 %v207, 0.0
    %v222 = vmax.f32 %v212, 0.0
    %v223 = vld [vmem:[%s3] sm:$0xff]
    %v224 = vld [vmem:[%s3 + $0x8] sm:$0xff]
    %v225 = vld [vmem:[%s3 + $0x10] sm:$0xff]
    %v226 = vld [vmem:[%s3 + $0x18] sm:$0xff]
    %v227 = vld [vmem:[%s4] sm:$0xff]
    %v228 = vld [vmem:[%s4 + $0x8] sm:$0xff]
    %v229 = vld [vmem:[%s4 + $0x10] sm:$0xff]
    %v230 = vld [vmem:[%s4 + $0x18] sm:$0xff]
    %232 = vset.pattern.permute.xlu0 0
    %233 = vperm.xlu0 %232, %v227
    %v234 = vpop.permute.xlu0 %233
    %237 = vset.pattern.permute.xlu0 0
    %238 = vperm.xlu0 %237, %v228
    %v239 = vpop.permute.xlu0 %238
    %242 = vset.pattern.permute.xlu0 0
    %243 = vperm.xlu0 %242, %v229
    %v244 = vpop.permute.xlu0 %243
    %247 = vset.pattern.permute.xlu0 0
    %248 = vperm.xlu0 %247, %v230
    %v249 = vpop.permute.xlu0 %248
    %vm251 = vcmask 523264
    %v253 = vsel %vm251, %v223, 0
    %v256 = vsel %vm251, %v224, 0
    %v259 = vsel %vm251, %v225, 0
    %v262 = vsel %vm251, %v226, 0
    %264 = vmatprep.subr.mxu0 0.0
    %265 = vmatpush1.msra.mxu0 %v215
    %266 = vmatprep.subr.mxu0 0.0
    %267 = vmatpush1.msra.mxu0 %v216
    %268 = vmatprep.subr.mxu0 0.0
    %269 = vmatpush1.msra.mxu0 %v217
    %270 = vmatprep.subr.mxu0 0.0
    %271 = vmatpush1.msra.mxu0 %v218
    %272 = vmatprep.subr.mxu0 0.0
    %273 = vmatpush1.msra.mxu0 %v219
    %274 = vmatprep.subr.mxu0 0.0
    %275 = vmatpush1.msra.mxu0 %v220
    %276 = vmatprep.subr.mxu0 0.0
    %277 = vmatpush1.msra.mxu0 %v221
    %278 = vmatprep.subr.mxu0 0.0
    %279 = vmatpush1.msra.mxu0 %v222
    %280 = vmatprep.subr.mxu0 0.0
    %281 = vmatpush1.msra.mxu0 0.0
    %282 = vmatprep.subr.mxu0 0.0
    %283 = vmatpush1.msra.mxu0 0.0
    %284 = vmatprep.subr.mxu0 0.0
    %285 = vmatpush1.msra.mxu0 0.0
    %286 = vmatprep.subr.mxu0 0.0
    %287 = vmatpush1.msra.mxu0 0.0
    %288 = vmatprep.subr.mxu0 0.0
    %289 = vmatpush1.msra.mxu0 0.0
    %290 = vmatprep.subr.mxu0 0.0
    %291 = vmatpush1.msra.mxu0 0.0
    %292 = vmatprep.subr.mxu0 0.0
    %293 = vmatpush1.msra.mxu0 0.0
    %294 = vmatprep.subr.mxu0 0.0
    %295 = vmatpush1.msra.mxu0 0.0
    %296 = vmatprep.subr.mxu0 0.0
    %297 = vmatpush1.msra.mxu0 0.0
    %298 = vmatprep.subr.mxu0 0.0
    %299 = vmatpush1.msra.mxu0 0.0
    %300 = vmatprep.subr.mxu0 0.0
    %301 = vmatpush1.msra.mxu0 0.0
    %302 = vmatprep.subr.mxu0 0.0
    %303 = vmatpush1.msra.mxu0 0.0
    %304 = vmatprep.subr.mxu0 0.0
    %305 = vmatpush1.msra.mxu0 0.0
    %306 = vmatprep.subr.mxu0 0.0
    %307 = vmatpush1.msra.mxu0 0.0
    %308 = vmatprep.subr.mxu0 0.0
    %309 = vmatpush1.msra.mxu0 0.0
    %310 = vmatprep.subr.mxu0 0.0
    %311 = vmatpush1.msra.mxu0 0.0
    %312 = vmatprep.subr.mxu0 0.0
    %313 = vmatpush1.msra.mxu0 0.0
    %314 = vmatprep.subr.mxu0 0.0
    %315 = vmatpush1.msra.mxu0 0.0
    %316 = vmatprep.subr.mxu0 0.0
    %317 = vmatpush1.msra.mxu0 0.0
    %318 = vmatprep.subr.mxu0 0.0
    %319 = vmatpush1.msra.mxu0 0.0
    %320 = vmatprep.subr.mxu0 0.0
    %321 = vmatpush1.msra.mxu0 0.0
    %322 = vmatprep.subr.mxu0 0.0
    %323 = vmatpush1.msra.mxu0 0.0
    %324 = vmatprep.subr.mxu0 0.0
    %325 = vmatpush1.msra.mxu0 0.0
    %326 = vmatprep.subr.mxu0 0.0
    %327 = vmatpush1.msra.mxu0 0.0
    %328 = vmatprep.mubr.f32.mxu0 0.0
    %329 = vmatmul.mubr.f32.gmra.mrb[0].mxu0 %v253
    %v330 = vpop.f32.mrb[0].mxu0
    %v331 = vadd.f32 %v234, %v330
    %v332 = vpop.f32.mrb[0].mxu0
    %333 = vmatprep.mubr.f32.mxu0 0.0
    %334 = vmatmul.mubr.f32.gmra.mrb[0].mxu0 %v256
    %v335 = vpop.f32.mrb[0].mxu0
    %v336 = vadd.f32 %v239, %v335
    %v337 = vpop.f32.mrb[0].mxu0
    %338 = vmatprep.mubr.f32.mxu0 0.0
    %339 = vmatmul.mubr.f32.gmra.mrb[0].mxu0 %v259
    %v340 = vpop.f32.mrb[0].mxu0
    %v341 = vadd.f32 %v244, %v340
    %v342 = vpop.f32.mrb[0].mxu0
    %343 = vmatprep.mubr.f32.mxu0 0.0
    %344 = vmatmul.mubr.f32.gmra.mrb[0].mxu0 %v262
    %v345 = vpop.f32.mrb[0].mxu0
    %v346 = vadd.f32 %v249, %v345
    %v347 = vpop.f32.mrb[0].mxu0
    %348 = vdwg.mxu0
    %v349 = vmax.f32 %v331, 0.0
    %v350 = vmax.f32 %v336, 0.0
    %v351 = vmax.f32 %v341, 0.0
    %v352 = vmax.f32 %v346, 0.0
    %v353 = vld [vmem:[%s5] sm:$0xf]
    %v354 = vld [vmem:[%s6] sm:$0xf]
    %356 = vset.pattern.permute.xlu0 0
    %357 = vperm.xlu0 %356, %v354
    %v358 = vpop.permute.xlu0 %357
    %vm360 = vcmask 261120
    %v362 = vsel %vm360, %v353, 0
    %364 = vmatprep.subr.mxu0 0.0
    %365 = vmatpush1.msra.mxu0 %v349
    %366 = vmatprep.subr.mxu0 0.0
    %367 = vmatpush1.msra.mxu0 %v350
    %368 = vmatprep.subr.mxu0 0.0
    %369 = vmatpush1.msra.mxu0 %v351
    %370 = vmatprep.subr.mxu0 0.0
    %371 = vmatpush1.msra.mxu0 %v352
    %372 = vmatprep.subr.mxu0 0.0
    %373 = vmatpush1.msra.mxu0 0.0
    %374 = vmatprep.subr.mxu0 0.0
    %375 = vmatpush1.msra.mxu0 0.0
    %376 = vmatprep.subr.mxu0 0.0
    %377 = vmatpush1.msra.mxu0 0.0
    %378 = vmatprep.subr.mxu0 0.0
    %379 = vmatpush1.msra.mxu0 0.0
    %380 = vmatprep.subr.mxu0 0.0
    %381 = vmatpush1.msra.mxu0 0.0
    %382 = vmatprep.subr.mxu0 0.0
    %383 = vmatpush1.msra.mxu0 0.0
    %384 = vmatprep.subr.mxu0 0.0
    %385 = vmatpush1.msra.mxu0 0.0
    %386 = vmatprep.subr.mxu0 0.0
    %387 = vmatpush1.msra.mxu0 0.0
    %388 = vmatprep.subr.mxu0 0.0
    %389 = vmatpush1.msra.mxu0 0.0
    %390 = vmatprep.subr.mxu0 0.0
    %391 = vmatpush1.msra.mxu0 0.0
    %392 = vmatprep.subr.mxu0 0.0
    %393 = vmatpush1.msra.mxu0 0.0
    %394 = vmatprep.subr.mxu0 0.0
    %395 = vmatpush1.msra.mxu0 0.0
    %396 = vmatprep.subr.mxu0 0.0
    %397 = vmatpush1.msra.mxu0 0.0
    %398 = vmatprep.subr.mxu0 0.0
    %399 = vmatpush1.msra.mxu0 0.0
    %400 = vmatprep.subr.mxu0 0.0
    %401 = vmatpush1.msra.mxu0 0.0
    %402 = vmatprep.subr.mxu0 0.0
    %403 = vmatpush1.msra.mxu0 0.0
    %404 = vmatprep.subr.mxu0 0.0
    %405 = vmatpush1.msra.mxu0 0.0
    %406 = vmatprep.subr.mxu0 0.0
    %407 = vmatpush1.msra.mxu0 0.0
    %408 = vmatprep.subr.mxu0 0.0
    %409 = vmatpush1.msra.mxu0 0.0
    %410 = vmatprep.subr.mxu0 0.0
    %411 = vmatpush1.msra.mxu0 0.0
    %412 = vmatprep.subr.mxu0 0.0
    %413 = vmatpush1.msra.mxu0 0.0
    %414 = vmatprep.subr.mxu0 0.0
    %415 = vmatpush1.msra.mxu0 0.0
    %416 = vmatprep.subr.mxu0 0.0
    %417 = vmatpush1.msra.mxu0 0.0
    %418 = vmatprep.subr.mxu0 0.0
    %419 = vmatpush1.msra.mxu0 0.0
    %420 = vmatprep.subr.mxu0 0.0
    %421 = vmatpush1.msra.mxu0 0.0
    %422 = vmatprep.subr.mxu0 0.0
    %423 = vmatpush1.msra.mxu0 0.0
    %424 = vmatprep.subr.mxu0 0.0
    %425 = vmatpush1.msra.mxu0 0.0
    %426 = vmatprep.subr.mxu0 0.0
    %427 = vmatpush1.msra.mxu0 0.0
    %428 = vmatprep.mubr.f32.mxu0 0.0
    %429 = vmatmul.mubr.f32.gmra.mrb[0].mxu0 %v362
    %v430 = vpop.f32.mrb[0].mxu0
    %v431 = vadd.f32 %v358, %v430
    %v432 = vpop.f32.mrb[0].mxu0
    %433 = vdwg.mxu0
    %434 = vst [vmem:[#allocation2] sm:$0xf] %v431
    // Predicated region
    $region30: #{tpu_custom_call.1} parent=1 // pred_check
      _
    $region31: #{tpu_custom_call.1} parent=1 // pred_check_branch
      %436 = sbr.rel (0) target = $region33
    $region32: #{tpu_custom_call.1} parent=1 // pred_region
      %s438 = ssub.s32 64, 64
      %439 = vsyncadd [#allocation3], %s438
      %s441 = sshll.u32 [#allocation2], 4
      %s442 = int_to_ptr.vmem [resolvable:$true] %s441
      %444 = dma.vmem_to_hbm [thread:$0]  %s442, 64, %s7, [#allocation3]
    $region33: #{tpu_custom_call.1} parent=1 // pred_fallthru
      _
    // Predicated region
    $region34: #{tpu_custom_call.1} parent=1 // pred_check
      _
    $region35: #{tpu_custom_call.1} parent=1 // pred_check_branch
      %446 = sbr.rel (0) target = $region37
    $region36: #{tpu_custom_call.1} parent=1 // pred_region
      %447 = dma.done [#allocation3], 64
    $region37: #{tpu_custom_call.1} parent=1 // pred_fallthru
      _
    %448 = vsyncpa [#allocation3], 1

</llo_original>
